<compile_context>
chip_gen: v6e
topology: v6e:2x2x1
jax: 0.10.0
libtpu: 0.0.40
codegen_flags: <defaults>
</compile_context>

<pallas_src>
import functools

import jax
import jax.numpy as jnp
from jax.experimental import pallas as pl
from jax.experimental.pallas import tpu as pltpu

_LANE = 128  # vreg lane width


def _ceil_div(a, b):
    return -(-a // b)


@functools.lru_cache(maxsize=1)
def _device_kind():
    try:
        return jax.devices()[0].device_kind.lower()
    except Exception:  # pragma: no cover - defensive
        return ""


def _lambda_kernel(x_ref, o_ref, *, lambd, compute_dtype):
    # Elementwise hot path: load tile, apply the stored lambda, store tile.
    x = x_ref[...]
    if compute_dtype is not None:
        # Optional lower-precision compute (e.g. bf16) for transcendental-heavy
        # lambdas on v6e/v7x where EUP throughput can become the bottleneck.
        x = x.astype(compute_dtype)
    o_ref[...] = lambd(x).astype(o_ref.dtype)


def lambda_forward(
    lambd,
    x,
    *,
    target_block_bytes=None,
    min_pallas_bytes=256 << 10,
    compute_dtype=None,
):
    """Apply `lambd` elementwise to `x` via a tiled, lane-dense Pallas kernel.

    Equivalent to PyTorch `Lambda(lambd)(x)`.  Shape-preserving elementwise
    lambdas take the Pallas path; anything else (or tiny inputs) falls back to
    calling `lambd(x)` directly, which is exactly the module's semantics.
    """
    orig_shape = x.shape
    in_dtype = x.dtype
    n = int(x.size)
    itemsize = jnp.dtype(in_dtype).itemsize

    # ---- small-input / degenerate fast path --------------------------------
    if n == 0 or n * itemsize < min_pallas_bytes:
        return lambd(x)

    # ---- verify the lambda is shape-preserving; pick output dtype ----------
    try:
        out_abs = jax.eval_shape(lambd, jax.ShapeDtypeStruct(x.shape, in_dtype))
        shape_preserving = getattr(out_abs, "shape", None) == x.shape
    except Exception:
        shape_preserving = False
    if not shape_preserving:
        # TODO(synk): non-elementwise lambdas (transposes / F.pad / reductions)
        # need their own layout-aware kernels; fall back to direct application.
        return lambd(x)
    out_dtype = out_abs.dtype
    out_itemsize = jnp.dtype(out_dtype).itemsize

    # Sublane packing: sub-32-bit dtypes pack along sublanes, so the
    # second-minor block dim must be a multiple of 8 * packing factor.
    pack = max(1, 4 // max(1, min(itemsize, out_itemsize)))
    sub = 8 * pack
    blk_itemsize = max(itemsize, out_itemsize)

    # ---- generation-aware block-size target ---------------------------------
    kind = _device_kind()
    is_v7 = "v7" in kind
    if target_block_bytes is None:
        if is_v7:
            target_block_bytes = 6 << 20   # 4 buffers -> 24 MiB, under 32 MiB scoped
        elif "v6" in kind:
            target_block_bytes = 4 << 20   # 16 MiB buffers, under 32 MiB scoped
        else:
            target_block_bytes = 2 << 20   # 8 MiB buffers, fits v5e 16 MiB scoped

    # ---- choose a lane-dense column count (multiple of 128) ----------------
    # Prefer a width that divides n exactly (no padding); otherwise pad the
    # tail of the last row only (< col elements, edge values to stay in-domain).
    col = None
    max_col = min(2048, (n // _LANE) * _LANE)
    for c in range(max_col, _LANE - 1, -_LANE):
        if n % c == 0:
            col = c
            break
    if col is None:
        col = _LANE if n < 4096 else 512

    rows = _ceil_div(n, col)

    # ---- choose the row-block size ------------------------------------------
    blk_rows = max(sub, (target_block_bytes // (col * blk_itemsize)) // sub * sub)
    if blk_rows >= rows:
        rows_per_block = rows                       # one block covers everything
        if is_v7 and rows >= 2 * sub:
            # Keep >= 2 grid steps so both v7x TensorCores get work.
            rows_per_block = max(sub, (rows // 2) // sub * sub)
    else:
        rows_per_block = blk_rows
    grid = (_ceil_div(rows, rows_per_block),)

    # ---- flatten (+ tiny tail pad if needed) --------------------------------
    padded = rows * col
    flat = x.reshape(-1)
    if padded != n:
        flat = jnp.pad(flat, (0, padded - n), mode="edge")
    x2d = flat.reshape(rows, col)

    kernel = functools.partial(_lambda_kernel, lambd=lambd, compute_dtype=compute_dtype)

    out2d = pl.pallas_call(
        kernel,
        out_shape=jax.ShapeDtypeStruct((rows, col), out_dtype),
        grid=grid,
        in_specs=[pl.BlockSpec((rows_per_block, col), lambda i: (i, 0))],
        out_specs=pl.BlockSpec((rows_per_block, col), lambda i: (i, 0)),
        compiler_params=pltpu.CompilerParams(
            dimension_semantics=("parallel",),
        ),
    )(x2d)

    out_flat = out2d.reshape(-1)
    if padded != n:
        out_flat = out_flat[:n]
    return out_flat.reshape(orig_shape)


if __name__ == "__main__":
    key = jax.random.PRNGKey(0)

    # The concrete lambda the module would be constructed with (elementwise gate).
    lambd = lambda t: t * jax.nn.sigmoid(t)

    # Primary small NCHW input consistent with how Lambda is used in TFGridNet.
    x = jax.random.normal(key, (2, 4, 16, 16), dtype=jnp.float32)
    y_ref = lambd(x)

    # 1) Default path: small input takes the fast path (== lambd(x)).
    y_fast = lambda_forward(lambd, x)
    jax.block_until_ready(y_fast)
    assert y_fast.shape == x.shape and y_fast.dtype == x.dtype
    assert jnp.max(jnp.abs(y_fast - y_ref)) < 1e-5

    # 2) Same input forced through the Pallas kernel path.
    y_pal = lambda_forward(lambd, x, min_pallas_bytes=0)
    jax.block_until_ready(y_pal)
    assert y_pal.shape == x.shape and y_pal.dtype == x.dtype
    assert jnp.max(jnp.abs(y_pal - y_ref)) < 1e-5

    # 3) Ragged shape: exercises the (tiny) tail-pad + masked last block path.
    k1, k2, k3 = jax.random.split(key, 3)
    x_odd = jax.random.normal(k1, (3, 5, 7, 33), dtype=jnp.float32)
    y_odd = lambda_forward(lambd, x_odd, min_pallas_bytes=0)
    jax.block_until_ready(y_odd)
    assert y_odd.shape == x_odd.shape
    assert jnp.max(jnp.abs(y_odd - lambd(x_odd))) < 1e-5

    # 4) Multi-block grid: small tensor but tiny block target so the grid has
    #    several pipelined steps.
    x_mb = jax.random.normal(k2, (2, 8, 64, 128), dtype=jnp.float32)
    y_mb = lambda_forward(lambd, x_mb, min_pallas_bytes=0, target_block_bytes=64 << 10)
    jax.block_until_ready(y_mb)
    assert y_mb.shape == x_mb.shape
    assert jnp.max(jnp.abs(y_mb - lambd(x_mb))) < 1e-5

    # 5) Packed dtype (bf16) through the kernel path.
    x_bf = jax.random.normal(k3, (2, 8, 16, 128), dtype=jnp.bfloat16)
    y_bf = lambda_forward(lambd, x_bf, min_pallas_bytes=0)
    jax.block_until_ready(y_bf)
    assert y_bf.shape == x_bf.shape and y_bf.dtype == x_bf.dtype
    assert jnp.max(jnp.abs(y_bf.astype(jnp.float32) - lambd(x_bf).astype(jnp.float32))) < 2e-2

    print("KERNEL_OK")
</pallas_src>

<mosaic_0001>
module attributes {stable_mosaic.version = 11 : i64} {
  func.func @_lambda_kernel(%arg0: i32, %arg1: memref<1x2048xf32, #tpu.memory_space<vmem>>, %arg2: memref<1x2048xf32, #tpu.memory_space<vmem>>) attributes {dimension_semantics = [#tpu.dimension_semantics<parallel>], iteration_bounds = array<i64: 1>, scalar_prefetch = 0 : i64, scratch_operands = 0 : i64, tpu.core_type = #tpu.core_type<tc>, window_params = [{transform_indices = @transform_0, window_bounds = array<i64: 1, 2048>}, {transform_indices = @transform_1, window_bounds = array<i64: 1, 2048>}]} {
    %c0 = arith.constant 0 : index
    %c0_0 = arith.constant 0 : index
    %0 = vector.load %arg1[%c0, %c0_0] : memref<1x2048xf32, #tpu.memory_space<vmem>>, vector<1x2048xf32>
    %1 = arith.negf %0 : vector<1x2048xf32>
    %2 = math.exp %1 : vector<1x2048xf32>
    %cst = arith.constant 1.000000e+00 : f32
    %3 = vector.broadcast %cst : f32 to vector<1x2048xf32>
    %4 = arith.addf %3, %2 : vector<1x2048xf32>
    %5 = arith.divf %3, %4 : vector<1x2048xf32>
    %6 = arith.mulf %0, %5 : vector<1x2048xf32>
    %c0_1 = arith.constant 0 : index
    %c0_2 = arith.constant 0 : index
    %7 = vector.load %arg2[%c0_1, %c0_2] : memref<1x2048xf32, #tpu.memory_space<vmem>>, vector<1x2048xf32>
    tpu.vector_store %arg2[%c0_1, %c0_2], %6 {strides = array<i32>} : memref<1x2048xf32, #tpu.memory_space<vmem>>, vector<1x2048xf32>,
    return
  }
  func.func @transform_0(%arg0: i32) -> (i32, i32) {
    %c0_i32 = arith.constant 0 : i32
    %c0_i32_0 = arith.constant 0 : i32
    return %arg0, %c0_i32 : i32, i32
  }
  func.func @transform_1(%arg0: i32) -> (i32, i32) {
    %c0_i32 = arith.constant 0 : i32
    %c0_i32_0 = arith.constant 0 : i32
    return %arg0, %c0_i32 : i32, i32
  }
}

</mosaic_0001>

<llo_original>
// kernel: tpu_custom_call.1
$region0: #{tpu_custom_call.1}
  #allocation0 [shape = 'u32[]', space=smem, size = 0x4, offset = 0x4, fixed_abs, tag = 'smem constant byte address 0x4 - core index']
  #allocation1 [shape = 'u32[144,128]{1,0:T(1,128)}', space=vmem, size = 0x12000, scoped, tag = 'internal scratch']
  %s0 = inlined_call_operand.hbm [shape: f32[1,2048], index: 0, kind: input, shape index: {}]
  %s1 = inlined_call_operand.hbm [shape: f32[1,2048], index: 1, kind: output, shape index: {}]
  %s2 = sld [smem:[#allocation0]]
  $region18: #{tpu_custom_call.1} parent=0
    _
  %s4 = ssub.s32 1, %s2
  %s5 = scalar_select 0, %s4, %s2
  $region1: #{tpu_custom_call.1} parent=0
    #allocation2 [shape = 'u8[8192]{0}', space=vmem, size = 0x2000, scoped, tag = 'input window, operand 0, single buffered']
    #allocation3 [shape = 's32[1]{0}', space=sflag, size = 0x4, scoped, tag = 'scoped memory for tpu_custom_call.1']
    #allocation4 [shape = 's32[1]{0}', space=sflag, size = 0x4, scoped, tag = 'scoped memory for tpu_custom_call.1']
    #allocation5 [shape = 'u8[8192]{0}', space=vmem, size = 0x2000, scoped, tag = 'output window, operand 0, single buffered']
    %6 = vsyncpa [#allocation3], 0
    %7 = vsyncpa [#allocation4], 0
    // Predicated region
    $region2: #{tpu_custom_call.1} parent=1 // pred_check
      _
    $region3: #{tpu_custom_call.1} parent=1 // pred_check_branch
      %9 = sbr.rel (0) target = $region5
    $region4: #{tpu_custom_call.1} parent=1 // pred_region
      %s11 = ssub.s32 256, 256
      %12 = vsyncadd [#allocation3], %s11
      %s14 = sshll.u32 [#allocation2], 4
      %s15 = int_to_ptr.vmem [resolvable:$true] %s14
      %17 = dma.hbm_to_vmem [thread:$0]  %s0, 256, %s15, [#allocation3]
    $region5: #{tpu_custom_call.1} parent=1 // pred_fallthru
      _
    // Predicated region
    $region6: #{tpu_custom_call.1} parent=1 // pred_check
      _
    $region7: #{tpu_custom_call.1} parent=1 // pred_check_branch
      %19 = sbr.rel (0) target = $region9
    $region8: #{tpu_custom_call.1} parent=1 // pred_region
      %20 = dma.done [#allocation3], 256
    $region9: #{tpu_custom_call.1} parent=1 // pred_fallthru
      _
    %v21 = vld [vmem:[#allocation2] sm:$0xff]
    %v22 = vld [vmem:[#allocation2 + $0x8] sm:$0xff]
    %v23 = vxor.u32 %v21, 2147483648
    %v24 = vxor.u32 %v22, 2147483648
    %v25 = vmul.f32 %v23, 1.442695
    %v26 = vpow.pop %v25
    %v27 = vmul.f32 %v24, 1.442695
    %v28 = vpow.pop %v27
    %v29 = vadd.f32 %v26, 1.0
    %v30 = vadd.f32 %v28, 1.0
    %v31 = vrcp.pop %v29
    %v32 = vmul.f32 1.0, %v31
    %v33 = vrcp.pop %v30
    %v34 = vmul.f32 1.0, %v33
    %v35 = vmul.f32 %v21, %v32
    %v36 = vmul.f32 %v22, %v34
    %37 = vst [vmem:[#allocation5] sm:$0xff] %v35
    %38 = vst [vmem:[#allocation5 + $0x8] sm:$0xff] %v36
    // Predicated region
    $region10: #{tpu_custom_call.1} parent=1 // pred_check
      _
    $region11: #{tpu_custom_call.1} parent=1 // pred_check_branch
      %40 = sbr.rel (0) target = $region13
    $region12: #{tpu_custom_call.1} parent=1 // pred_region
      %s42 = ssub.s32 256, 256
      %43 = vsyncadd [#allocation4], %s42
      %s45 = sshll.u32 [#allocation5], 4
      %s46 = int_to_ptr.vmem [resolvable:$true] %s45
      %48 = dma.vmem_to_hbm [thread:$0]  %s46, 256, %s1, [#allocation4]
    $region13: #{tpu_custom_call.1} parent=1 // pred_fallthru
      _
    // Predicated region
    $region14: #{tpu_custom_call.1} parent=1 // pred_check
      _
    $region15: #{tpu_custom_call.1} parent=1 // pred_check_branch
      %50 = sbr.rel (0) target = $region17
    $region16: #{tpu_custom_call.1} parent=1 // pred_region
      %51 = dma.done [#allocation4], 256
    $region17: #{tpu_custom_call.1} parent=1 // pred_fallthru
      _
    %52 = vsyncpa [#allocation3], 1
    %53 = vsyncpa [#allocation4], 1

</llo_original>
